<compile_context>
chip_gen: v7x
topology: tpu7x:2x2x1
jax: 0.10.0
libtpu: 0.0.40
codegen_flags: <defaults>
</compile_context>

<pallas_src>
import jax
import jax.numpy as jnp
from jax.experimental import pallas as pl
from jax.experimental.pallas import tpu as pltpu


def _fold_conv_weight(w_oihw, width):
    """Fold an OIHW 3x3 kernel into a banded (3*(W+2)*Cin, W*Cout) matrix M with
        M[dy*(W+2)*Cin + (w+dx)*Cin + ci, w*Cout + co] = w[co, ci, dy, dx]
    so that (dy-stacked padded input rows) @ M performs the whole 3x3 conv for a
    row of output pixels in a single lane-dense matmul."""
    Cout, Cin, KH, KW = w_oihw.shape
    w_hwio = jnp.transpose(w_oihw, (2, 3, 1, 0))              # (KH, KW, Cin, Cout)
    M = jnp.zeros((KH, width + 2, Cin, width, Cout), w_oihw.dtype)
    ow = jnp.arange(width)
    for dx in range(KW):
        upd = jnp.broadcast_to(w_hwio[:, dx, :, :], (width, KH, Cin, Cout))
        M = M.at[:, ow + dx, :, ow, :].set(upd)               # band for this dx
    return M.reshape(KH * (width + 2) * Cin, width * Cout)


def conv_bn_stats_kernel(x_ref, m_ref, b_ref, y_ref, s_ref, ss_ref):
    """Per-batch 3x3 conv as a single lane-dense matmul + BN partial statistics.

    x_ref : (1, H+2, (W+2)*Cin)    padded rows, channels interleaved on lanes
    m_ref : (3*(W+2)*Cin, W*Cout)  folded banded conv weights
    b_ref : (1, W*Cout)            bias tiled across W
    y_ref : (1, H, W*Cout)         conv output (lane-dense)
    s_ref : (1, 1, W*Cout)         partial sum over H        (for BN mean)
    ss_ref: (1, 1, W*Cout)         partial sum of squares    (for BN var)
    """
    H = x_ref.shape[1] - 2
    x = x_ref[0]                                              # (H+2, (W+2)*Cin)
    # Stack the three dy-shifted row slabs along lanes -> (H, 3*(W+2)*Cin).
    xs = jnp.concatenate([x[dy:dy + H, :] for dy in range(3)], axis=1)
    y = jnp.dot(xs, m_ref[...], preferred_element_type=jnp.float32)   # (H, W*Cout)
    y = y + b_ref[0, :]
    y_ref[0] = y.astype(y_ref.dtype)
    s_ref[0] = jnp.sum(y, axis=0, keepdims=True)
    ss_ref[0] = jnp.sum(y * y, axis=0, keepdims=True)


def bn_relu_kernel(y_ref, scale_ref, shift_ref, o_ref):
    """Fused BN (precomputed per-lane scale/shift) + ReLU on a (rows, 128k) slab."""
    z = y_ref[...] * scale_ref[0, :] + shift_ref[0, :]
    o_ref[...] = jnp.maximum(z, 0.0).astype(o_ref.dtype)


def initial_conv_forward(x_nchw, w_oihw, bias, gamma, beta, eps=1e-5):
    """Forward pass of InitialConv. Inputs/outputs are NCHW float32."""
    N, Cin, H, W = x_nchw.shape
    Cout = w_oihw.shape[0]
    lanes = W * Cout                       # 128 for the toy shape -> lane-dense

    # ---- wrapper-side layout plumbing ----
    x_nhwc = jnp.transpose(x_nchw, (0, 2, 3, 1))
    x_pad = jnp.pad(x_nhwc, ((0, 0), (1, 1), (1, 1), (0, 0)))
    x_rows = x_pad.reshape(N, H + 2, (W + 2) * Cin)            # channels on lanes
    m_folded = _fold_conv_weight(w_oihw, W)                    # (3*(W+2)*Cin, lanes)
    b_lane = jnp.tile(bias, W).reshape(1, lanes)

    # ---- Pallas kernel #1: conv (single matmul) + BN partial stats ----
    # TODO(synk): for production spatial sizes, tile H into row strips (2-row halo
    # via the index_map) and set vmem_limit_bytes for v7x's 64 MiB VMEM.
    conv_out, psum, psumsq = pl.pallas_call(
        conv_bn_stats_kernel,
        out_shape=(
            jax.ShapeDtypeStruct((N, H, lanes), jnp.float32),
            jax.ShapeDtypeStruct((N, 1, lanes), jnp.float32),
            jax.ShapeDtypeStruct((N, 1, lanes), jnp.float32),
        ),
        grid=(N,),
        in_specs=[
            pl.BlockSpec((1, H + 2, (W + 2) * Cin), lambda n: (n, 0, 0)),
            pl.BlockSpec((3 * (W + 2) * Cin, lanes), lambda n: (0, 0)),
            pl.BlockSpec((1, lanes), lambda n: (0, 0)),
        ],
        out_specs=(
            pl.BlockSpec((1, H, lanes), lambda n: (n, 0, 0)),
            pl.BlockSpec((1, 1, lanes), lambda n: (n, 0, 0)),
            pl.BlockSpec((1, 1, lanes), lambda n: (n, 0, 0)),
        ),
        compiler_params=pltpu.CompilerParams(dimension_semantics=("parallel",)),
    )(x_rows, m_folded, b_lane)

    # ---- BatchNorm2d training-mode statistics from the kernel partials ----
    # (biased variance, eps=1e-5, per-channel over N*H*W — matches PyTorch).
    count = N * H * W
    sum_c = jnp.sum(psum.reshape(N, W, Cout), axis=(0, 1))
    sumsq_c = jnp.sum(psumsq.reshape(N, W, Cout), axis=(0, 1))
    mean = sum_c / count
    var = jnp.maximum(sumsq_c / count - mean * mean, 0.0)
    scale = gamma / jnp.sqrt(var + eps)
    shift = beta - mean * scale
    scale_lane = jnp.tile(scale, W).reshape(1, lanes)
    shift_lane = jnp.tile(shift, W).reshape(1, lanes)

    # ---- Pallas kernel #2: fused BN + ReLU on a lane-dense (N*H, lanes) slab ----
    rows = N * H
    # Row-tile so there are >=2 balanced "parallel" steps (keeps both v7x TCs
    # busy) with blocks as large as possible.
    row_block = rows
    for cand in (512, 256, 128, 64, 32, 16, 8):
        if rows >= 2 * cand and rows % cand == 0:
            row_block = cand
            break
    y_flat = conv_out.reshape(rows, lanes)
    out_flat = pl.pallas_call(
        bn_relu_kernel,
        out_shape=jax.ShapeDtypeStruct((rows, lanes), jnp.float32),
        grid=(rows // row_block,),
        in_specs=[
            pl.BlockSpec((row_block, lanes), lambda i: (i, 0)),
            pl.BlockSpec((1, lanes), lambda i: (0, 0)),
            pl.BlockSpec((1, lanes), lambda i: (0, 0)),
        ],
        out_specs=pl.BlockSpec((row_block, lanes), lambda i: (i, 0)),
        input_output_aliases={0: 0},      # write ReLU output in place over conv_out
        compiler_params=pltpu.CompilerParams(dimension_semantics=("parallel",)),
    )(y_flat, scale_lane, shift_lane)

    return jnp.transpose(out_flat.reshape(N, H, W, Cout), (0, 3, 1, 2))  # NCHW


def _reference_forward(x_nchw, w_oihw, bias, gamma, beta, eps=1e-5):
    """Pure-JAX reference (PyTorch semantics) for correctness check."""
    conv = jax.lax.conv_general_dilated(
        x_nchw, w_oihw, window_strides=(1, 1), padding=((1, 1), (1, 1)),
        dimension_numbers=("NCHW", "OIHW", "NCHW"))
    conv = conv + bias.reshape(1, -1, 1, 1)
    mean = jnp.mean(conv, axis=(0, 2, 3), keepdims=True)
    var = jnp.mean(jnp.square(conv - mean), axis=(0, 2, 3), keepdims=True)
    bn = (conv - mean) / jnp.sqrt(var + eps)
    bn = bn * gamma.reshape(1, -1, 1, 1) + beta.reshape(1, -1, 1, 1)
    return jnp.maximum(bn, 0.0)


if __name__ == "__main__":
    key = jax.random.PRNGKey(0)
    k_x, k_w, k_b = jax.random.split(key, 3)

    N, Cin, H, W = 2, 4, 16, 16
    Cout = 8

    x = jax.random.normal(k_x, (N, Cin, H, W), dtype=jnp.float32)
    w = 0.1 * jax.random.normal(k_w, (Cout, Cin, 3, 3), dtype=jnp.float32)
    b = 0.05 * jax.random.normal(k_b, (Cout,), dtype=jnp.float32)
    gamma = jnp.ones((Cout,), dtype=jnp.float32)   # BatchNorm2d weight init
    beta = jnp.zeros((Cout,), dtype=jnp.float32)   # BatchNorm2d bias init

    fwd = jax.jit(initial_conv_forward)
    out = jax.block_until_ready(fwd(x, w, b, gamma, beta))

    ref = _reference_forward(x, w, b, gamma, beta)
    assert out.shape == (N, Cout, H, W)
    assert jnp.allclose(out, ref, atol=1e-4, rtol=1e-4)

    print("KERNEL_OK")
</pallas_src>

<mosaic_0001>
module attributes {stable_mosaic.version = 11 : i64} {
  func.func @conv_bn_stats_kernel(%arg0: i32, %arg1: memref<1x18x72xf32, #tpu.memory_space<vmem>>, %arg2: memref<216x128xf32, #tpu.memory_space<vmem>>, %arg3: memref<1x128xf32, #tpu.memory_space<vmem>>, %arg4: memref<1x16x128xf32, #tpu.memory_space<vmem>>, %arg5: memref<1x1x128xf32, #tpu.memory_space<vmem>>, %arg6: memref<1x1x128xf32, #tpu.memory_space<vmem>>) attributes {dimension_semantics = [#tpu.dimension_semantics<parallel>], iteration_bounds = array<i64: 2>, scalar_prefetch = 0 : i64, scratch_operands = 0 : i64, tpu.core_type = #tpu.core_type<tc>, window_params = [{transform_indices = @transform_0, window_bounds = array<i64: 1, 18, 72>}, {pipeline_mode = #tpu.pipeline_mode<synchronous>, transform_indices = @transform_1, window_bounds = array<i64: 216, 128>}, {pipeline_mode = #tpu.pipeline_mode<synchronous>, transform_indices = @transform_2, window_bounds = array<i64: 1, 128>}, {transform_indices = @transform_3, window_bounds = array<i64: 1, 16, 128>}, {transform_indices = @transform_4, window_bounds = array<i64: 1, 1, 128>}, {transform_indices = @transform_5, window_bounds = array<i64: 1, 1, 128>}]} {
    %c0 = arith.constant 0 : index
    %c0_0 = arith.constant 0 : index
    %c0_1 = arith.constant 0 : index
    %0 = vector.load %arg1[%c0, %c0_0, %c0_1] : memref<1x18x72xf32, #tpu.memory_space<vmem>>, vector<1x18x72xf32>
    %1 = vector.shape_cast %0 : vector<1x18x72xf32> to vector<18x72xf32>
    %2 = vector.extract_strided_slice %1 {offsets = [0, 0], sizes = [16, 72], strides = [1, 1]} : vector<18x72xf32> to vector<16x72xf32>
    %3 = vector.extract_strided_slice %1 {offsets = [1, 0], sizes = [16, 72], strides = [1, 1]} : vector<18x72xf32> to vector<16x72xf32>
    %4 = vector.extract_strided_slice %1 {offsets = [2, 0], sizes = [16, 72], strides = [1, 1]} : vector<18x72xf32> to vector<16x72xf32>
    %5 = tpu.concatenate %2, %3, %4 in 1 : vector<16x72xf32>, vector<16x72xf32>, vector<16x72xf32> -> vector<16x216xf32>
    %c0_2 = arith.constant 0 : index
    %c0_3 = arith.constant 0 : index
    %6 = vector.load %arg2[%c0_2, %c0_3] : memref<216x128xf32, #tpu.memory_space<vmem>>, vector<216x128xf32>
    %cst = arith.constant dense<0.000000e+00> : vector<16x128xf32>
    %7 = tpu.matmul %5, %6, %cst {dimension_numbers = #tpu.dot_dimension_numbers<[1], [0], [0], [1], [0, 0, 1, 1], [], []>} : vector<16x216xf32>, vector<216x128xf32>, vector<16x128xf32> -> vector<16x128xf32>
    %c0_4 = arith.constant 0 : index
    %c0_5 = arith.constant 0 : index
    %8 = vector.load %arg3[%c0_4, %c0_5] : memref<1x128xf32, #tpu.memory_space<vmem>>, vector<1x128xf32>
    %9 = vector.shape_cast %8 : vector<1x128xf32> to vector<128xf32>
    %10 = vector.shape_cast %9 : vector<128xf32> to vector<1x128xf32>
    %11 = vector.broadcast %10 : vector<1x128xf32> to vector<16x128xf32>
    %12 = arith.addf %7, %11 : vector<16x128xf32>
    %c0_6 = arith.constant 0 : index
    %c0_7 = arith.constant 0 : index
    %c0_8 = arith.constant 0 : index
    %13 = vector.load %arg4[%c0_6, %c0_7, %c0_8] : memref<1x16x128xf32, #tpu.memory_space<vmem>>, vector<1x16x128xf32>
    %14 = vector.shape_cast %13 : vector<1x16x128xf32> to vector<16x128xf32>
    %15 = vector.shape_cast %12 : vector<16x128xf32> to vector<1x16x128xf32>
    tpu.vector_store %arg4[%c0_6, %c0_7, %c0_8], %15 {strides = array<i32>} : memref<1x16x128xf32, #tpu.memory_space<vmem>>, vector<1x16x128xf32>,
    %cst_9 = arith.constant dense<0.000000e+00> : vector<128xf32>
    %16 = vector.multi_reduction <add>, %12, %cst_9 [0] : vector<16x128xf32> to vector<128xf32>
    %17 = vector.shape_cast %16 : vector<128xf32> to vector<1x128xf32>
    %c0_10 = arith.constant 0 : index
    %c0_11 = arith.constant 0 : index
    %c0_12 = arith.constant 0 : index
    %18 = vector.load %arg5[%c0_10, %c0_11, %c0_12] : memref<1x1x128xf32, #tpu.memory_space<vmem>>, vector<1x1x128xf32>
    %19 = vector.shape_cast %18 : vector<1x1x128xf32> to vector<1x128xf32>
    %20 = vector.shape_cast %17 : vector<1x128xf32> to vector<1x1x128xf32>
    tpu.vector_store %arg5[%c0_10, %c0_11, %c0_12], %20 {strides = array<i32>} : memref<1x1x128xf32, #tpu.memory_space<vmem>>, vector<1x1x128xf32>,
    %21 = arith.mulf %12, %12 : vector<16x128xf32>
    %cst_13 = arith.constant dense<0.000000e+00> : vector<128xf32>
    %22 = vector.multi_reduction <add>, %21, %cst_13 [0] : vector<16x128xf32> to vector<128xf32>
    %23 = vector.shape_cast %22 : vector<128xf32> to vector<1x128xf32>
    %c0_14 = arith.constant 0 : index
    %c0_15 = arith.constant 0 : index
    %c0_16 = arith.constant 0 : index
    %24 = vector.load %arg6[%c0_14, %c0_15, %c0_16] : memref<1x1x128xf32, #tpu.memory_space<vmem>>, vector<1x1x128xf32>
    %25 = vector.shape_cast %24 : vector<1x1x128xf32> to vector<1x128xf32>
    %26 = vector.shape_cast %23 : vector<1x128xf32> to vector<1x1x128xf32>
    tpu.vector_store %arg6[%c0_14, %c0_15, %c0_16], %26 {strides = array<i32>} : memref<1x1x128xf32, #tpu.memory_space<vmem>>, vector<1x1x128xf32>,
    return
  }
  func.func @transform_0(%arg0: i32) -> (i32, i32, i32) {
    %c0_i32 = arith.constant 0 : i32
    %c0_i32_0 = arith.constant 0 : i32
    %c0_i32_1 = arith.constant 0 : i32
    return %arg0, %c0_i32, %c0_i32_0 : i32, i32, i32
  }
  func.func @transform_1(%arg0: i32) -> (i32, i32) {
    %c0_i32 = arith.constant 0 : i32
    %c0_i32_0 = arith.constant 0 : i32
    %c0_i32_1 = arith.constant 0 : i32
    return %c0_i32, %c0_i32_0 : i32, i32
  }
  func.func @transform_2(%arg0: i32) -> (i32, i32) {
    %c0_i32 = arith.constant 0 : i32
    %c0_i32_0 = arith.constant 0 : i32
    %c0_i32_1 = arith.constant 0 : i32
    return %c0_i32, %c0_i32_0 : i32, i32
  }
  func.func @transform_3(%arg0: i32) -> (i32, i32, i32) {
    %c0_i32 = arith.constant 0 : i32
    %c0_i32_0 = arith.constant 0 : i32
    %c0_i32_1 = arith.constant 0 : i32
    return %arg0, %c0_i32, %c0_i32_0 : i32, i32, i32
  }
  func.func @transform_4(%arg0: i32) -> (i32, i32, i32) {
    %c0_i32 = arith.constant 0 : i32
    %c0_i32_0 = arith.constant 0 : i32
    %c0_i32_1 = arith.constant 0 : i32
    return %arg0, %c0_i32, %c0_i32_0 : i32, i32, i32
  }
  func.func @transform_5(%arg0: i32) -> (i32, i32, i32) {
    %c0_i32 = arith.constant 0 : i32
    %c0_i32_0 = arith.constant 0 : i32
    %c0_i32_1 = arith.constant 0 : i32
    return %arg0, %c0_i32, %c0_i32_0 : i32, i32, i32
  }
}

module attributes {stable_mosaic.version = 11 : i64} {
  func.func @bn_relu_kernel(%arg0: i32, %arg1: memref<16x128xf32, #tpu.memory_space<vmem>>, %arg2: memref<1x128xf32, #tpu.memory_space<vmem>>, %arg3: memref<1x128xf32, #tpu.memory_space<vmem>>, %arg4: memref<16x128xf32, #tpu.memory_space<vmem>>) attributes {dimension_semantics = [#tpu.dimension_semantics<parallel>], iteration_bounds = array<i64: 2>, scalar_prefetch = 0 : i64, scratch_operands = 0 : i64, tpu.core_type = #tpu.core_type<tc>, window_params = [{transform_indices = @transform_0, window_bounds = array<i64: 16, 128>}, {pipeline_mode = #tpu.pipeline_mode<synchronous>, transform_indices = @transform_1, window_bounds = array<i64: 1, 128>}, {pipeline_mode = #tpu.pipeline_mode<synchronous>, transform_indices = @transform_2, window_bounds = array<i64: 1, 128>}, {transform_indices = @transform_3, window_bounds = array<i64: 16, 128>}]} {
    %c0 = arith.constant 0 : index
    %c0_0 = arith.constant 0 : index
    %0 = vector.load %arg1[%c0, %c0_0] : memref<16x128xf32, #tpu.memory_space<vmem>>, vector<16x128xf32>
    %c0_1 = arith.constant 0 : index
    %c0_2 = arith.constant 0 : index
    %1 = vector.load %arg2[%c0_1, %c0_2] : memref<1x128xf32, #tpu.memory_space<vmem>>, vector<1x128xf32>
    %2 = vector.shape_cast %1 : vector<1x128xf32> to vector<128xf32>
    %3 = vector.shape_cast %2 : vector<128xf32> to vector<1x128xf32>
    %4 = vector.broadcast %3 : vector<1x128xf32> to vector<16x128xf32>
    %5 = arith.mulf %0, %4 : vector<16x128xf32>
    %c0_3 = arith.constant 0 : index
    %c0_4 = arith.constant 0 : index
    %6 = vector.load %arg3[%c0_3, %c0_4] : memref<1x128xf32, #tpu.memory_space<vmem>>, vector<1x128xf32>
    %7 = vector.shape_cast %6 : vector<1x128xf32> to vector<128xf32>
    %8 = vector.shape_cast %7 : vector<128xf32> to vector<1x128xf32>
    %9 = vector.broadcast %8 : vector<1x128xf32> to vector<16x128xf32>
    %10 = arith.addf %5, %9 : vector<16x128xf32>
    %cst = arith.constant 0.000000e+00 : f32
    %11 = vector.broadcast %cst : f32 to vector<16x128xf32>
    %12 = arith.maximumf %10, %11 : vector<16x128xf32>
    %c0_5 = arith.constant 0 : index
    %c0_6 = arith.constant 0 : index
    %13 = vector.load %arg4[%c0_5, %c0_6] : memref<16x128xf32, #tpu.memory_space<vmem>>, vector<16x128xf32>
    tpu.vector_store %arg4[%c0_5, %c0_6], %12 {strides = array<i32>} : memref<16x128xf32, #tpu.memory_space<vmem>>, vector<16x128xf32>,
    return
  }
  func.func @transform_0(%arg0: i32) -> (i32, i32) {
    %c0_i32 = arith.constant 0 : i32
    %c0_i32_0 = arith.constant 0 : i32
    return %arg0, %c0_i32 : i32, i32
  }
  func.func @transform_1(%arg0: i32) -> (i32, i32) {
    %c0_i32 = arith.constant 0 : i32
    %c0_i32_0 = arith.constant 0 : i32
    %c0_i32_1 = arith.constant 0 : i32
    return %c0_i32, %c0_i32_0 : i32, i32
  }
  func.func @transform_2(%arg0: i32) -> (i32, i32) {
    %c0_i32 = arith.constant 0 : i32
    %c0_i32_0 = arith.constant 0 : i32
    %c0_i32_1 = arith.constant 0 : i32
    return %c0_i32, %c0_i32_0 : i32, i32
  }
  func.func @transform_3(%arg0: i32) -> (i32, i32) {
    %c0_i32 = arith.constant 0 : i32
    %c0_i32_0 = arith.constant 0 : i32
    return %arg0, %c0_i32 : i32, i32
  }
}

</mosaic_0001>

<llo_original>
// kernel: tile.18
$region0: #{tile.18}
  #allocation0 [shape = 's32[1]{0}', space=sflag, size = 0x4, scoped, tag = 'scoped memory for tile.18']
  %s0 = inlined_call_operand.vmem [shape: f32[8], index: 0, kind: input, shape index: {}]
  %s1 = inlined_call_operand.vmem [shape: f32[16,8], index: 1, kind: output, shape index: {}]
  // Predicated region
  $region2: #{tile.18} parent=0 // pred_check
    _
  $region3: #{tile.18} parent=0 // pred_check_branch
    %3 = sbr.rel (0) target = $region5
  $region4: #{tile.18} parent=0 // pred_region
    _
  $region5: #{tile.18} parent=0 // pred_fallthru
    _
  %v4 = vld [vmem:[%s0] ss:$0 sm:$0xff]
  %5 = vst [vmem:[%s1] sm:$0xff] %v4
  %s6 = scalar_lea.vmem %s1, 8
  %7 = vst [vmem:[%s6] sm:$0xff] %v4

// kernel: tile.19
$region0: #{tile.19}
  %s0 = inlined_call_operand.vmem [shape: f32[16,8], index: 0, kind: input, shape index: {}]
  %s1 = inlined_call_operand.vmem [shape: f32[1,128], index: 1, kind: output, shape index: {}]
  $region1: #{tile.19} parent=0
    #allocation0 [shape = 'u8[4096]{0}', space=vmem, size = 0x1000, scoped, tag = 'scoped mem for output reshape']
    %v2 = vld [vmem:[%s0] sm:$0x1]
    %vm3 = vcmask 64512
    %4 = vst.msk [vmem:[#allocation0] sm:$0x1] %vm3, %v2
    %s5 = scalar_lea.vmem %s0, 15
    %v6 = vld [vmem:[%s5] sm:$0x1]
    %7 = vrot.lane.b32.xlu0 %v6, 120
    %v8 = vpop.permute.xlu0 %7
    %vm9 = vcmask 1048512
    %10 = vst.msk [vmem:[#allocation0] sm:$0x1] %vm9, %v8
    %s11 = scalar_lea.vmem %s0, 14
    %v12 = vld [vmem:[%s11] sm:$0x1]
    %13 = vrot.lane.b32.xlu0 %v12, 112
    %v14 = vpop.permute.xlu0 %13
    %vm15 = vcmask 982912
    %16 = vst.msk [vmem:[#allocation0] sm:$0x1] %vm15, %v14
    %s17 = scalar_lea.vmem %s0, 13
    %v18 = vld [vmem:[%s17] sm:$0x1]
    %19 = vrot.lane.b32.xlu0 %v18, 104
    %v20 = vpop.permute.xlu0 %19
    %vm21 = vcmask 917312
    %22 = vst.msk [vmem:[#allocation0] sm:$0x1] %vm21, %v20
    %s23 = scalar_lea.vmem %s0, 12
    %v24 = vld [vmem:[%s23] sm:$0x1]
    %25 = vrot.lane.b32.xlu0 %v24, 96
    %v26 = vpop.permute.xlu0 %25
    %vm27 = vcmask 851712
    %28 = vst.msk [vmem:[#allocation0] sm:$0x1] %vm27, %v26
    %s29 = scalar_lea.vmem %s0, 11
    %v30 = vld [vmem:[%s29] sm:$0x1]
    %31 = vrot.lane.b32.xlu0 %v30, 88
    %v32 = vpop.permute.xlu0 %31
    %vm33 = vcmask 786112
    %34 = vst.msk [vmem:[#allocation0] sm:$0x1] %vm33, %v32
    %s35 = scalar_lea.vmem %s0, 10
    %v36 = vld [vmem:[%s35] sm:$0x1]
    %37 = vrot.lane.b32.xlu0 %v36, 80
    %v38 = vpop.permute.xlu0 %37
    %vm39 = vcmask 720512
    %40 = vst.msk [vmem:[#allocation0] sm:$0x1] %vm39, %v38
    %s41 = scalar_lea.vmem %s0, 9
    %v42 = vld [vmem:[%s41] sm:$0x1]
    %43 = vrot.lane.b32.xlu0 %v42, 72
    %v44 = vpop.permute.xlu0 %43
    %vm45 = vcmask 654912
    %46 = vst.msk [vmem:[#allocation0] sm:$0x1] %vm45, %v44
    %s47 = scalar_lea.vmem %s0, 8
    %v48 = vld [vmem:[%s47] sm:$0x1]
    %49 = vrot.lane.b32.xlu0 %v48, 64
    %v50 = vpop.permute.xlu0 %49
    %vm51 = vcmask 589312
    %52 = vst.msk [vmem:[#allocation0] sm:$0x1] %vm51, %v50
    %s53 = scalar_lea.vmem %s0, 7
    %v54 = vld [vmem:[%s53] sm:$0x1]
    %55 = vrot.lane.b32.xlu0 %v54, 56
    %v56 = vpop.permute.xlu0 %55
    %vm57 = vcmask 523712
    %58 = vst.msk [vmem:[#allocation0] sm:$0x1] %vm57, %v56
    %s59 = scalar_lea.vmem %s0, 6
    %v60 = vld [vmem:[%s59] sm:$0x1]
    %61 = vrot.lane.b32.xlu0 %v60, 48
    %v62 = vpop.permute.xlu0 %61
    %vm63 = vcmask 458112
    %64 = vst.msk [vmem:[#allocation0] sm:$0x1] %vm63, %v62
    %s65 = scalar_lea.vmem %s0, 5
    %v66 = vld [vmem:[%s65] sm:$0x1]
    %67 = vrot.lane.b32.xlu0 %v66, 40
    %v68 = vpop.permute.xlu0 %67
    %vm69 = vcmask 392512
    %70 = vst.msk [vmem:[#allocation0] sm:$0x1] %vm69, %v68
    %s71 = scalar_lea.vmem %s0, 4
    %v72 = vld [vmem:[%s71] sm:$0x1]
    %73 = vrot.lane.b32.xlu0 %v72, 32
    %v74 = vpop.permute.xlu0 %73
    %vm75 = vcmask 326912
    %76 = vst.msk [vmem:[#allocation0] sm:$0x1] %vm75, %v74
    %s77 = scalar_lea.vmem %s0, 3
    %v78 = vld [vmem:[%s77] sm:$0x1]
    %79 = vrot.lane.b32.xlu0 %v78, 24
    %v80 = vpop.permute.xlu0 %79
    %vm81 = vcmask 261312
    %82 = vst.msk [vmem:[#allocation0] sm:$0x1] %vm81, %v80
    %s83 = scalar_lea.vmem %s0, 2
    %v84 = vld [vmem:[%s83] sm:$0x1]
    %85 = vrot.lane.b32.xlu0 %v84, 16
    %v86 = vpop.permute.xlu0 %85
    %vm87 = vcmask 195712
    %88 = vst.msk [vmem:[#allocation0] sm:$0x1] %vm87, %v86
    %s89 = scalar_lea.vmem %s0, 1
    %v90 = vld [vmem:[%s89] sm:$0x1]
    %91 = vrot.lane.b32.xlu0 %v90, 8
    %v92 = vpop.permute.xlu0 %91
    %vm93 = vcmask 130112
    %94 = vst.msk [vmem:[#allocation0] sm:$0x1] %vm93, %v92
    %s96 = sshllo.u32 0, 1
    %v98 = vld [vmem:[#allocation0] sm:%s96]
    %s99 = sshllo.u32 0, 1
    %100 = vst [vmem:[%s1] sm:%s99] %v98

// kernel: initial_conv_forward.3
$region0: #{initial_conv_forward.3}
  #allocation0 [shape = 'u32[]', space=smem, size = 0x4, offset = 0x4, fixed_abs, tag = 'smem constant byte address 0x4 - core index']
  #allocation1 [shape = 'u32[144,128]{1,0:T(1,128)}', space=vmem, size = 0x12000, scoped, tag = 'internal scratch']
  %s0 = inlined_call_operand.vmem [shape: f32[32,128], index: 0, kind: input, shape index: {}, may-alias: {0,3}]
  %s1 = inlined_call_operand.vmem [shape: f32[1,128], index: 1, kind: input, shape index: {}]
  %s2 = inlined_call_operand.vmem [shape: f32[1,128], index: 2, kind: input, shape index: {}]
  %s3 = inlined_call_operand.vmem [shape: f32[32,128], index: 3, kind: output, shape index: {}, may-alias: {0,3}]
  %s4 = sld [smem:[#allocation0]]
  $region45: #{initial_conv_forward.3} parent=0
    _
  %s6 = ssub.s32 1, %s4
  %s7 = scalar_select 0, %s6, %s4
  loop: start=0, step=1, limit=4
  $region2: #{initial_conv_forward.3} parent=0 // loop_pre_header
    _
  $region3: #{initial_conv_forward.3} parent=0 // loop_header
    %s9 = sphi 0, %s13
    %p10 = scmp.ge.s32.totalorder %s9, 4
    %s19 = sphi 0, %s21
    %s22 = sphi 0, %s19
    %s23 = sphi 0, %s22
    %s39 = sphi 0, %s23
    %s43 = sphi 0, %s43
    %s45 = sphi 0, %s43
    %s46 = sphi 0, %s45
    %s60 = sphi 0, %s46
    %s64 = sphi 0, %s64
    %s66 = sphi 0, %s64
    %s67 = sphi 0, %s66
    %s81 = sphi 0, %s67
    %s87 = sphi 0, %s89
    %s90 = sphi 0, %s87
    %s91 = sphi 0, %s90
    %s107 = sphi 0, %s91
  $region4: #{initial_conv_forward.3} parent=0 // loop_header_branch
    %12 = sbr.rel (%p10) target = $region8
  $region5: #{initial_conv_forward.3} parent=0 // loop_body
    %s14 = ssub.s32 %s9, 1
    %s15 = ssub.s32 %s9, 2
    %s16 = sadd.s32 %s9, 1
    %s17 = ssub.s32 %s9, %s16
    %p18 = scmp.eq.s32.totalorder %s17, 0
    %s20 = sadd.s32 %s19, 1
    %s21 = scalar_select %p18, %s19, %s20
    %p24 = pneg %p18
    %p25 = scmp.eq.s32.totalorder %s9, 1
    %p26 = por %p24, %p25
    %p27 = scmp.ne.s32.totalorder %s19, %s22
    %p28 = scmp.eq.s32.totalorder %s9, 0
    %p29 = por %p27, %p28
    %p30 = scmp.ne.s32.totalorder %s19, %s22
    %p31 = scmp.eq.s32.totalorder %s14, 1
    %p32 = por %p30, %p31
    %p33 = scmp.ne.s32.totalorder %s22, %s23
    %p34 = scmp.eq.s32.totalorder %s14, 0
    %p35 = por %p33, %p34
    %p36 = scmp.ne.s32.totalorder %s22, %s23
    %p37 = scmp.eq.s32.totalorder %s15, 1
    %p38 = por %p36, %p37
    %p40 = scmp.ne.s32.totalorder %s23, %s39
    %p41 = scmp.eq.s32.totalorder %s15, 0
    %p42 = por %p40, %p41
    %s44 = sadd.s32 %s43, 1
    %p47 = scmp.eq.s32.totalorder %s9, 1
    %p48 = scmp.ne.s32.totalorder %s43, %s45
    %p49 = scmp.eq.s32.totalorder %s9, 0
    %p50 = por %p48, %p49
    %p51 = scmp.ne.s32.totalorder %s43, %s45
    %p52 = scmp.eq.s32.totalorder %s14, 1
    %p53 = por %p51, %p52
    %p54 = scmp.ne.s32.totalorder %s45, %s46
    %p55 = scmp.eq.s32.totalorder %s14, 0
    %p56 = por %p54, %p55
    %p57 = scmp.ne.s32.totalorder %s45, %s46
    %p58 = scmp.eq.s32.totalorder %s15, 1
    %p59 = por %p57, %p58
    %p61 = scmp.ne.s32.totalorder %s46, %s60
    %p62 = scmp.eq.s32.totalorder %s15, 0
    %p63 = por %p61, %p62
    %s65 = sadd.s32 %s64, 1
    %p68 = scmp.eq.s32.totalorder %s9, 1
    %p69 = scmp.ne.s32.totalorder %s64, %s66
    %p70 = scmp.eq.s32.totalorder %s9, 0
    %p71 = por %p69, %p70
    %p72 = scmp.ne.s32.totalorder %s64, %s66
    %p73 = scmp.eq.s32.totalorder %s14, 1
    %p74 = por %p72, %p73
    %p75 = scmp.ne.s32.totalorder %s66, %s67
    %p76 = scmp.eq.s32.totalorder %s14, 0
    %p77 = por %p75, %p76
    %p78 = scmp.ne.s32.totalorder %s66, %s67
    %p79 = scmp.eq.s32.totalorder %s15, 1
    %p80 = por %p78, %p79
    %p82 = scmp.ne.s32.totalorder %s67, %s81
    %p83 = scmp.eq.s32.totalorder %s15, 0
    %p84 = por %p82, %p83
    %s85 = ssub.s32 %s9, %s16
    %p86 = scmp.eq.s32.totalorder %s85, 0
    %s88 = sadd.s32 %s87, 1
    %s89 = scalar_select %p86, %s87, %s88
    %p92 = pneg %p86
    %p93 = scmp.eq.s32.totalorder %s9, 1
    %p94 = por %p92, %p93
    %p95 = scmp.ne.s32.totalorder %s87, %s90
    %p96 = scmp.eq.s32.totalorder %s9, 0
    %p97 = por %p95, %p96
    %p98 = scmp.ne.s32.totalorder %s87, %s90
    %p99 = scmp.eq.s32.totalorder %s14, 1
    %p100 = por %p98, %p99
    %p101 = scmp.ne.s32.totalorder %s90, %s91
    %p102 = scmp.eq.s32.totalorder %s14, 0
    %p103 = por %p101, %p102
    %p104 = scmp.ne.s32.totalorder %s90, %s91
    %p105 = scmp.eq.s32.totalorder %s15, 1
    %p106 = por %p104, %p105
    %p108 = scmp.ne.s32.totalorder %s91, %s107
    %p109 = scmp.eq.s32.totalorder %s15, 0
    %p110 = por %p108, %p109
    %p111 = scmp.le.s32.totalorder 1, %s9
    %p112 = scmp.lt.s32.totalorder %s9, 3
    %p113 = pnand %p111, %p112
    %p114 = pneg %p113
    // Predicated region
    $region9: #{initial_conv_forward.3} parent=5 // pred_check
      _
    $region10: #{initial_conv_forward.3} parent=5 // pred_check_branch
      %116 = sbr.rel (%p113) target = $region12
    $region11: #{initial_conv_forward.3} parent=5 // pred_region
      %s117 = ssub.s32 %s9, 1
      // Predicated region
      $region13: #{initial_conv_forward.3} parent=11 // pred_check
        %p118 = pneg %p56
      $region14: #{initial_conv_forward.3} parent=11 // pred_check_branch
        %120 = sbr.rel (%p118) target = $region16
      $region15: #{initial_conv_forward.3} parent=11 // pred_region
        _
      $region16: #{initial_conv_forward.3} parent=11 // pred_fallthru
        _
      // Predicated region
      $region17: #{initial_conv_forward.3} parent=11 // pred_check
        %p121 = pneg %p77
      $region18: #{initial_conv_forward.3} parent=11 // pred_check_branch
        %123 = sbr.rel (%p121) target = $region20
      $region19: #{initial_conv_forward.3} parent=11 // pred_region
        _
      $region20: #{initial_conv_forward.3} parent=11 // pred_fallthru
        _
    $region12: #{initial_conv_forward.3} parent=5 // pred_fallthru
      _
    %p124 = scmp.lt.s32.totalorder %s9, 2
    // Predicated region
    $region21: #{initial_conv_forward.3} parent=5 // pred_check
      %p125 = pneg %p124
    $region22: #{initial_conv_forward.3} parent=5 // pred_check_branch
      %127 = sbr.rel (%p125) target = $region24
    $region23: #{initial_conv_forward.3} parent=5 // pred_region
      // Predicated region
      $region25: #{initial_conv_forward.3} parent=23 // pred_check
        %p128 = pneg %p29
      $region26: #{initial_conv_forward.3} parent=23 // pred_check_branch
        %130 = sbr.rel (%p128) target = $region28
      $region27: #{initial_conv_forward.3} parent=23 // pred_region
        %s131 = smul.u32 2, %s9
        %p132 = scmp.lt.s32.totalorder %s131, 3
        %s133 = scalar_select %p132, %s131, 3
        %s134 = smul.addr %s133, 8
        %s135 = scalar_lea.vmem %s0, %s134
        %s136 = smul.u32 2, %s9
      $region28: #{initial_conv_forward.3} parent=23 // pred_fallthru
        _
    $region24: #{initial_conv_forward.3} parent=5 // pred_fallthru
      _
    %p137 = scmp.le.s32.totalorder 1, %s9
    %p138 = scmp.lt.s32.totalorder %s9, 3
    %p139 = pnand %p137, %p138
    %p140 = pneg %p139
    // Predicated region
    $region29: #{initial_conv_forward.3} parent=5 // pred_check
      _
    $region30: #{initial_conv_forward.3} parent=5 // pred_check_branch
      %142 = sbr.rel (%p139) target = $region32
    $region31: #{initial_conv_forward.3} parent=5 // pred_region
      %s143 = ssub.s32 %s9, 1
      %s144 = smul.u32 2, %s14
      %p145 = scmp.lt.s32.totalorder %s144, 3
      %s146 = scalar_select %p145, %s144, 3
      %s147 = smul.addr %s146, 8
      %s148 = scalar_lea.vmem %s0, %s147
      %p149 = pneg %p35
      %p150 = pneg %p32
      %p151 = pneg %p56
      %p152 = pneg %p53
      %p153 = pneg %p77
      %p154 = pneg %p74
      %p155 = pneg %p103
      %p156 = pneg %p100
      %s157 = smul.u32 2, %s14
      %p158 = scmp.lt.s32.totalorder %s157, 3
      %s159 = scalar_select %p158, %s157, 3
      %s160 = smul.addr %s159, 8
      %s161 = scalar_lea.vmem %s3, %s160
      %s162 = smul.u32 2, %s14
      %p163 = scmp.lt.s32.totalorder %s162, 3
      %s164 = scalar_select %p163, %s162, 3
      %s165 = smul.addr %s164, 8
      %s166 = scalar_lea.vmem %s0, %s165
      %s167 = smul.u32 2, %s14
      %s168 = smul.u32 2, %s14
      %p169 = scmp.lt.s32.totalorder %s168, 3
      %s170 = scalar_select %p169, %s168, 3
      %s171 = smul.addr %s170, 8
      %s172 = scalar_lea.vmem %s3, %s171
      %s173 = smul.u32 2, %s14
      %v174 = vld [vmem:[%s166] sm:$0xff]
      %v175 = vld [vmem:[%s166 + $0x8] sm:$0xff]
      %v176 = vld [vmem:[%s1] sm:$0x1]
      %v178 = vlaneseq
      %v179 = vshrl.u32 %v178, 7
      %v180 = vsub.s32 0, %v179
      %v181 = vrot.slane %v176, %v180
      %v183 = vmul.f32 %v174, %v181
      %v184 = vmul.f32 %v175, %v181
      %v185 = vld [vmem:[%s2] sm:$0x1]
      %v187 = vlaneseq
      %v188 = vshrl.u32 %v187, 7
      %v189 = vsub.s32 0, %v188
      %v190 = vrot.slane %v185, %v189
      %v192 = vadd.f32 %v183, %v190
      %v193 = vadd.f32 %v184, %v190
      %v194 = vmax.f32 %v192, 0.0
      %v195 = vmax.f32 %v193, 0.0
      %196 = vst [vmem:[%s172] sm:$0xff] %v194
      %197 = vst [vmem:[%s172 + $0x8] sm:$0xff] %v195
      %s198 = smul.u32 2, %s14
      %p199 = scmp.lt.s32.totalorder %s198, 3
      %s200 = scalar_select %p199, %s198, 3
      %s201 = smul.addr %s200, 8
      %s202 = scalar_lea.vmem %s3, %s201
      // Predicated region
      $region33: #{initial_conv_forward.3} parent=31 // pred_check
        %p203 = pneg %p100
      $region34: #{initial_conv_forward.3} parent=31 // pred_check_branch
        %205 = sbr.rel (%p203) target = $region36
      $region35: #{initial_conv_forward.3} parent=31 // pred_region
        %s206 = smul.u32 2, %s14
      $region36: #{initial_conv_forward.3} parent=31 // pred_fallthru
        _
    $region32: #{initial_conv_forward.3} parent=5 // pred_fallthru
      _
    %p207 = scmp.le.s32.totalorder 2, %s9
    // Predicated region
    $region37: #{initial_conv_forward.3} parent=5 // pred_check
      %p208 = pneg %p207
    $region38: #{initial_conv_forward.3} parent=5 // pred_check_branch
      %210 = sbr.rel (%p208) target = $region40
    $region39: #{initial_conv_forward.3} parent=5 // pred_region
      %s211 = ssub.s32 %s9, 2
      // Predicated region
      $region41: #{initial_conv_forward.3} parent=39 // pred_check
        %p212 = pneg %p106
      $region42: #{initial_conv_forward.3} parent=39 // pred_check_branch
        %214 = sbr.rel (%p212) target = $region44
      $region43: #{initial_conv_forward.3} parent=39 // pred_region
        %s215 = smul.u32 2, %s15
        %p216 = scmp.lt.s32.totalorder %s215, 3
        %s217 = scalar_select %p216, %s215, 3
        %s218 = smul.addr %s217, 8
        %s219 = scalar_lea.vmem %s3, %s218
      $region44: #{initial_conv_forward.3} parent=39 // pred_fallthru
        _
    $region40: #{initial_conv_forward.3} parent=5 // pred_fallthru
      _
  $region6: #{initial_conv_forward.3} parent=0 // loop_footer
    %s13 = sadd.s32 1, %s9
  $region7: #{initial_conv_forward.3} parent=0 // loop_footer_branch
    %8 = sbr.rel target = $region3
  $region8: #{initial_conv_forward.3} parent=0 // loop_exit
    _

// kernel: initial_conv_forward.2
$region0: #{initial_conv_forward.2}
  #allocation0 [shape = 'u32[]', space=smem, size = 0x4, offset = 0x4, fixed_abs, tag = 'smem constant byte address 0x4 - core index']
  #allocation1 [shape = 'u32[144,128]{1,0:T(1,128)}', space=vmem, size = 0x12000, scoped, tag = 'internal scratch']
  %s0 = inlined_call_operand.vmem [shape: f32[2,18,72], index: 0, kind: input, shape index: {}]
  %s1 = inlined_call_operand.vmem [shape: f32[216,128], index: 1, kind: input, shape index: {}]
  %s2 = inlined_call_operand.vmem [shape: f32[1,128], index: 2, kind: input, shape index: {}]
  %s3 = inlined_call_operand.vmem [shape: f32[2,16,128], index: 3, kind: output, shape index: {0}]
  %s4 = inlined_call_operand.vmem [shape: f32[2,1,128], index: 4, kind: output, shape index: {1}]
  %s5 = inlined_call_operand.vmem [shape: f32[2,1,128], index: 5, kind: output, shape index: {2}]
  %6 = xla_tuple %s3, %s4, %s5
  %s7 = sld [smem:[#allocation0]]
  $region61: #{initial_conv_forward.2} parent=0
    _
  %s9 = ssub.s32 1, %s7
  %s10 = scalar_select 0, %s9, %s7
  loop: start=0, step=1, limit=4
  $region2: #{initial_conv_forward.2} parent=0 // loop_pre_header
    _
  $region3: #{initial_conv_forward.2} parent=0 // loop_header
    %s12 = sphi 0, %s16
    %p13 = scmp.ge.s32.totalorder %s12, 4
    %s22 = sphi 0, %s24
    %s25 = sphi 0, %s22
    %s26 = sphi 0, %s25
    %s42 = sphi 0, %s26
    %s46 = sphi 0, %s46
    %s48 = sphi 0, %s46
    %s49 = sphi 0, %s48
    %s63 = sphi 0, %s49
    %s67 = sphi 0, %s67
    %s69 = sphi 0, %s67
    %s70 = sphi 0, %s69
    %s84 = sphi 0, %s70
    %s90 = sphi 0, %s92
    %s93 = sphi 0, %s90
    %s94 = sphi 0, %s93
    %s110 = sphi 0, %s94
    %s116 = sphi 0, %s118
    %s119 = sphi 0, %s116
    %s120 = sphi 0, %s119
    %s136 = sphi 0, %s120
    %s142 = sphi 0, %s144
    %s145 = sphi 0, %s142
    %s146 = sphi 0, %s145
    %s162 = sphi 0, %s146
  $region4: #{initial_conv_forward.2} parent=0 // loop_header_branch
    %15 = sbr.rel (%p13) target = $region8
  $region5: #{initial_conv_forward.2} parent=0 // loop_body
    %s17 = ssub.s32 %s12, 1
    %s18 = ssub.s32 %s12, 2
    %s19 = sadd.s32 %s12, 1
    %s20 = ssub.s32 %s12, %s19
    %p21 = scmp.eq.s32.totalorder %s20, 0
    %s23 = sadd.s32 %s22, 1
    %s24 = scalar_select %p21, %s22, %s23
    %p27 = pneg %p21
    %p28 = scmp.eq.s32.totalorder %s12, 1
    %p29 = por %p27, %p28
    %p30 = scmp.ne.s32.totalorder %s22, %s25
    %p31 = scmp.eq.s32.totalorder %s12, 0
    %p32 = por %p30, %p31
    %p33 = scmp.ne.s32.totalorder %s22, %s25
    %p34 = scmp.eq.s32.totalorder %s17, 1
    %p35 = por %p33, %p34
    %p36 = scmp.ne.s32.totalorder %s25, %s26
    %p37 = scmp.eq.s32.totalorder %s17, 0
    %p38 = por %p36, %p37
    %p39 = scmp.ne.s32.totalorder %s25, %s26
    %p40 = scmp.eq.s32.totalorder %s18, 1
    %p41 = por %p39, %p40
    %p43 = scmp.ne.s32.totalorder %s26, %s42
    %p44 = scmp.eq.s32.totalorder %s18, 0
    %p45 = por %p43, %p44
    %s47 = sadd.s32 %s46, 1
    %p50 = scmp.eq.s32.totalorder %s12, 1
    %p51 = scmp.ne.s32.totalorder %s46, %s48
    %p52 = scmp.eq.s32.totalorder %s12, 0
    %p53 = por %p51, %p52
    %p54 = scmp.ne.s32.totalorder %s46, %s48
    %p55 = scmp.eq.s32.totalorder %s17, 1
    %p56 = por %p54, %p55
    %p57 = scmp.ne.s32.totalorder %s48, %s49
    %p58 = scmp.eq.s32.totalorder %s17, 0
    %p59 = por %p57, %p58
    %p60 = scmp.ne.s32.totalorder %s48, %s49
    %p61 = scmp.eq.s32.totalorder %s18, 1
    %p62 = por %p60, %p61
    %p64 = scmp.ne.s32.totalorder %s49, %s63
    %p65 = scmp.eq.s32.totalorder %s18, 0
    %p66 = por %p64, %p65
    %s68 = sadd.s32 %s67, 1
    %p71 = scmp.eq.s32.totalorder %s12, 1
    %p72 = scmp.ne.s32.totalorder %s67, %s69
    %p73 = scmp.eq.s32.totalorder %s12, 0
    %p74 = por %p72, %p73
    %p75 = scmp.ne.s32.totalorder %s67, %s69
    %p76 = scmp.eq.s32.totalorder %s17, 1
    %p77 = por %p75, %p76
    %p78 = scmp.ne.s32.totalorder %s69, %s70
    %p79 = scmp.eq.s32.totalorder %s17, 0
    %p80 = por %p78, %p79
    %p81 = scmp.ne.s32.totalorder %s69, %s70
    %p82 = scmp.eq.s32.totalorder %s18, 1
    %p83 = por %p81, %p82
    %p85 = scmp.ne.s32.totalorder %s70, %s84
    %p86 = scmp.eq.s32.totalorder %s18, 0
    %p87 = por %p85, %p86
    %s88 = ssub.s32 %s12, %s19
    %p89 = scmp.eq.s32.totalorder %s88, 0
    %s91 = sadd.s32 %s90, 1
    %s92 = scalar_select %p89, %s90, %s91
    %p95 = pneg %p89
    %p96 = scmp.eq.s32.totalorder %s12, 1
    %p97 = por %p95, %p96
    %p98 = scmp.ne.s32.totalorder %s90, %s93
    %p99 = scmp.eq.s32.totalorder %s12, 0
    %p100 = por %p98, %p99
    %p101 = scmp.ne.s32.totalorder %s90, %s93
    %p102 = scmp.eq.s32.totalorder %s17, 1
    %p103 = por %p101, %p102
    %p104 = scmp.ne.s32.totalorder %s93, %s94
    %p105 = scmp.eq.s32.totalorder %s17, 0
    %p106 = por %p104, %p105
    %p107 = scmp.ne.s32.totalorder %s93, %s94
    %p108 = scmp.eq.s32.totalorder %s18, 1
    %p109 = por %p107, %p108
    %p111 = scmp.ne.s32.totalorder %s94, %s110
    %p112 = scmp.eq.s32.totalorder %s18, 0
    %p113 = por %p111, %p112
    %s114 = ssub.s32 %s12, %s19
    %p115 = scmp.eq.s32.totalorder %s114, 0
    %s117 = sadd.s32 %s116, 1
    %s118 = scalar_select %p115, %s116, %s117
    %p121 = pneg %p115
    %p122 = scmp.eq.s32.totalorder %s12, 1
    %p123 = por %p121, %p122
    %p124 = scmp.ne.s32.totalorder %s116, %s119
    %p125 = scmp.eq.s32.totalorder %s12, 0
    %p126 = por %p124, %p125
    %p127 = scmp.ne.s32.totalorder %s116, %s119
    %p128 = scmp.eq.s32.totalorder %s17, 1
    %p129 = por %p127, %p128
    %p130 = scmp.ne.s32.totalorder %s119, %s120
    %p131 = scmp.eq.s32.totalorder %s17, 0
    %p132 = por %p130, %p131
    %p133 = scmp.ne.s32.totalorder %s119, %s120
    %p134 = scmp.eq.s32.totalorder %s18, 1
    %p135 = por %p133, %p134
    %p137 = scmp.ne.s32.totalorder %s120, %s136
    %p138 = scmp.eq.s32.totalorder %s18, 0
    %p139 = por %p137, %p138
    %s140 = ssub.s32 %s12, %s19
    %p141 = scmp.eq.s32.totalorder %s140, 0
    %s143 = sadd.s32 %s142, 1
    %s144 = scalar_select %p141, %s142, %s143
    %p147 = pneg %p141
    %p148 = scmp.eq.s32.totalorder %s12, 1
    %p149 = por %p147, %p148
    %p150 = scmp.ne.s32.totalorder %s142, %s145
    %p151 = scmp.eq.s32.totalorder %s12, 0
    %p152 = por %p150, %p151
    %p153 = scmp.ne.s32.totalorder %s142, %s145
    %p154 = scmp.eq.s32.totalorder %s17, 1
    %p155 = por %p153, %p154
    %p156 = scmp.ne.s32.totalorder %s145, %s146
    %p157 = scmp.eq.s32.totalorder %s17, 0
    %p158 = por %p156, %p157
    %p159 = scmp.ne.s32.totalorder %s145, %s146
    %p160 = scmp.eq.s32.totalorder %s18, 1
    %p161 = por %p159, %p160
    %p163 = scmp.ne.s32.totalorder %s146, %s162
    %p164 = scmp.eq.s32.totalorder %s18, 0
    %p165 = por %p163, %p164
    %p166 = scmp.le.s32.totalorder 1, %s12
    %p167 = scmp.lt.s32.totalorder %s12, 3
    %p168 = pnand %p166, %p167
    %p169 = pneg %p168
    // Predicated region
    $region9: #{initial_conv_forward.2} parent=5 // pred_check
      _
    $region10: #{initial_conv_forward.2} parent=5 // pred_check_branch
      %171 = sbr.rel (%p168) target = $region12
    $region11: #{initial_conv_forward.2} parent=5 // pred_region
      %s172 = ssub.s32 %s12, 1
      // Predicated region
      $region13: #{initial_conv_forward.2} parent=11 // pred_check
        %p173 = pneg %p59
      $region14: #{initial_conv_forward.2} parent=11 // pred_check_branch
        %175 = sbr.rel (%p173) target = $region16
      $region15: #{initial_conv_forward.2} parent=11 // pred_region
        _
      $region16: #{initial_conv_forward.2} parent=11 // pred_fallthru
        _
      // Predicated region
      $region17: #{initial_conv_forward.2} parent=11 // pred_check
        %p176 = pneg %p80
      $region18: #{initial_conv_forward.2} parent=11 // pred_check_branch
        %178 = sbr.rel (%p176) target = $region20
      $region19: #{initial_conv_forward.2} parent=11 // pred_region
        _
      $region20: #{initial_conv_forward.2} parent=11 // pred_fallthru
        _
    $region12: #{initial_conv_forward.2} parent=5 // pred_fallthru
      _
    %p179 = scmp.lt.s32.totalorder %s12, 2
    // Predicated region
    $region21: #{initial_conv_forward.2} parent=5 // pred_check
      %p180 = pneg %p179
    $region22: #{initial_conv_forward.2} parent=5 // pred_check_branch
      %182 = sbr.rel (%p180) target = $region24
    $region23: #{initial_conv_forward.2} parent=5 // pred_region
      // Predicated region
      $region25: #{initial_conv_forward.2} parent=23 // pred_check
        %p183 = pneg %p32
      $region26: #{initial_conv_forward.2} parent=23 // pred_check_branch
        %185 = sbr.rel (%p183) target = $region28
      $region27: #{initial_conv_forward.2} parent=23 // pred_region
        %p186 = scmp.lt.s32.totalorder %s12, 1
        %s187 = scalar_select %p186, %s12, 1
        %s188 = smul.addr %s187, 3
        %s189 = smul.addr %s188, 8
        %s190 = scalar_lea.vmem %s0, %s189
      $region28: #{initial_conv_forward.2} parent=23 // pred_fallthru
        _
    $region24: #{initial_conv_forward.2} parent=5 // pred_fallthru
      _
    %p191 = scmp.le.s32.totalorder 1, %s12
    %p192 = scmp.lt.s32.totalorder %s12, 3
    %p193 = pnand %p191, %p192
    %p194 = pneg %p193
    // Predicated region
    $region29: #{initial_conv_forward.2} parent=5 // pred_check
      _
    $region30: #{initial_conv_forward.2} parent=5 // pred_check_branch
      %196 = sbr.rel (%p193) target = $region32
    $region31: #{initial_conv_forward.2} parent=5 // pred_region
      %s197 = ssub.s32 %s12, 1
      %p198 = scmp.lt.s32.totalorder %s17, 1
      %s199 = scalar_select %p198, %s17, 1
      %s200 = smul.addr %s199, 3
      %s201 = smul.addr %s200, 8
      %s202 = scalar_lea.vmem %s0, %s201
      %p203 = pneg %p38
      %p204 = pneg %p35
      %p205 = pneg %p59
      %p206 = pneg %p56
      %p207 = pneg %p80
      %p208 = pneg %p77
      %p209 = pneg %p106
      %p210 = pneg %p103
      %p211 = scmp.lt.s32.totalorder %s17, 1
      %s212 = scalar_select %p211, %s17, 1
      %s213 = smul.addr %s212, 2
      %s214 = smul.addr %s213, 8
      %s215 = scalar_lea.vmem %s3, %s214
      %p216 = pneg %p132
      %p217 = pneg %p129
      %p218 = scmp.lt.s32.totalorder %s17, 1
      %s219 = scalar_select %p218, %s17, 1
      %s220 = scalar_lea.vmem %s4, %s219
      %p221 = pneg %p158
      %p222 = pneg %p155
      %p223 = scmp.lt.s32.totalorder %s17, 1
      %s224 = scalar_select %p223, %s17, 1
      %s225 = scalar_lea.vmem %s5, %s224
      %p226 = scmp.lt.s32.totalorder %s17, 1
      %s227 = scalar_select %p226, %s17, 1
      %s228 = smul.addr %s227, 3
      %s229 = smul.addr %s228, 8
      %s230 = scalar_lea.vmem %s0, %s229
      %p231 = scmp.lt.s32.totalorder %s17, 1
      %s232 = scalar_select %p231, %s17, 1
      %s233 = smul.addr %s232, 2
      %s234 = smul.addr %s233, 8
      %s235 = scalar_lea.vmem %s3, %s234
      %p236 = scmp.lt.s32.totalorder %s17, 1
      %s237 = scalar_select %p236, %s17, 1
      %s238 = scalar_lea.vmem %s4, %s237
      %p239 = scmp.lt.s32.totalorder %s17, 1
      %s240 = scalar_select %p239, %s17, 1
      %s241 = scalar_lea.vmem %s5, %s240
      %v242 = vld [vmem:[%s230] sm:$0xff]
      %v243 = vld [vmem:[%s230 + $0x8] sm:$0xff]
      %v244 = vld [vmem:[%s230 + $0x10] sm:$0x3]
      %vm248 = vcmask 1046528
      %v249 = vrot.slane %v242, 1
      %v250 = vrot.slane %v243, 1
      %v251 = vsel %vm248, %v249, %v250
      %v252 = vrot.slane %v244, 1
      %v253 = vsel %vm248, %v250, %v252
      %254 = vrot.lane.b32.xlu0 %v251, 72
      %v255 = vpop.permute.xlu0 %254
      %256 = vrot.lane.b32.xlu0 %v253, 72
      %v257 = vpop.permute.xlu0 %256
      %vm260 = vcmask 1045504
      %v261 = vrot.slane %v242, 2
      %v262 = vrot.slane %v243, 2
      %v263 = vsel %vm260, %v261, %v262
      %v264 = vrot.slane %v244, 2
      %v265 = vsel %vm260, %v262, %v264
      %266 = vrot.lane.b32.xlu0 %v263, 16
      %v267 = vpop.permute.xlu0 %266
      %268 = vrot.lane.b32.xlu0 %v265, 16
      %v269 = vpop.permute.xlu0 %268
      %vm272 = vcmask 588800
      %v273 = vsel %vm272, %v242, %v255
      %v274 = vsel %vm272, %v243, %v257
      %vm275 = vcmask 130048
      %v276 = vsel %vm275, %v255, %v267
      %v277 = vsel %vm275, %v257, %v269
      %v278 = vld [vmem:[%s1] sm:$0xff]
      %v279 = vld [vmem:[%s1 + $0x8] sm:$0xff]
      %v280 = vld [vmem:[%s1 + $0x10] sm:$0xff]
      %v281 = vld [vmem:[%s1 + $0x18] sm:$0xff]
      %v282 = vld [vmem:[%s1 + $0x20] sm:$0xff]
      %v283 = vld [vmem:[%s1 + $0x28] sm:$0xff]
      %v284 = vld [vmem:[%s1 + $0x30] sm:$0xff]
      %v285 = vld [vmem:[%s1 + $0x38] sm:$0xff]
      %v286 = vld [vmem:[%s1 + $0x40] sm:$0xff]
      %v287 = vld [vmem:[%s1 + $0x48] sm:$0xff]
      %v288 = vld [vmem:[%s1 + $0x50] sm:$0xff]
      %v289 = vld [vmem:[%s1 + $0x58] sm:$0xff]
      %v290 = vld [vmem:[%s1 + $0x60] sm:$0xff]
      %v291 = vld [vmem:[%s1 + $0x68] sm:$0xff]
      %v292 = vld [vmem:[%s1 + $0x70] sm:$0xff]
      %v293 = vld [vmem:[%s1 + $0x78] sm:$0xff]
      %v294 = vld [vmem:[%s1 + $0x80] sm:$0xff]
      %v295 = vld [vmem:[%s1 + $0x88] sm:$0xff]
      %v296 = vld [vmem:[%s1 + $0x90] sm:$0xff]
      %v297 = vld [vmem:[%s1 + $0x98] sm:$0xff]
      %v298 = vld [vmem:[%s1 + $0xa0] sm:$0xff]
      %v299 = vld [vmem:[%s1 + $0xa8] sm:$0xff]
      %v300 = vld [vmem:[%s1 + $0xb0] sm:$0xff]
      %v301 = vld [vmem:[%s1 + $0xb8] sm:$0xff]
      %v302 = vld [vmem:[%s1 + $0xc0] sm:$0xff]
      %v303 = vld [vmem:[%s1 + $0xc8] sm:$0xff]
      %v304 = vld [vmem:[%s1 + $0xd0] sm:$0xff]
      %v305 = vld [vmem:[%s2] sm:$0x1]
      %v307 = vlaneseq
      %v308 = vshrl.u32 %v307, 7
      %v309 = vsub.s32 0, %v308
      %v310 = vrot.slane %v305, %v309
      %vm312 = vcmask 719872
      %v314 = vsel %vm312, %v276, 0
      %v317 = vsel %vm312, %v277, 0
      %319 = vmatprep.subr.mxu0 0.0
      %320 = vmatpush1.msra.mxu0 %v278
      %321 = vmatprep.subr.mxu0 0.0
      %322 = vmatpush1.msra.mxu0 %v279
      %323 = vmatprep.subr.mxu0 0.0
      %324 = vmatpush1.msra.mxu0 %v280
      %325 = vmatprep.subr.mxu0 0.0
      %326 = vmatpush1.msra.mxu0 %v281
      %327 = vmatprep.subr.mxu0 0.0
      %328 = vmatpush1.msra.mxu0 %v282
      %329 = vmatprep.subr.mxu0 0.0
      %330 = vmatpush1.msra.mxu0 %v283
      %331 = vmatprep.subr.mxu0 0.0
      %332 = vmatpush1.msra.mxu0 %v284
      %333 = vmatprep.subr.mxu0 0.0
      %334 = vmatpush1.msra.mxu0 %v285
      %335 = vmatprep.subr.mxu0 0.0
      %336 = vmatpush1.msra.mxu0 %v286
      %337 = vmatprep.subr.mxu0 0.0
      %338 = vmatpush1.msra.mxu0 %v287
      %339 = vmatprep.subr.mxu0 0.0
      %340 = vmatpush1.msra.mxu0 %v288
      %341 = vmatprep.subr.mxu0 0.0
      %342 = vmatpush1.msra.mxu0 %v289
      %343 = vmatprep.subr.mxu0 0.0
      %344 = vmatpush1.msra.mxu0 %v290
      %345 = vmatprep.subr.mxu0 0.0
      %346 = vmatpush1.msra.mxu0 %v291
      %347 = vmatprep.subr.mxu0 0.0
      %348 = vmatpush1.msra.mxu0 %v292
      %349 = vmatprep.subr.mxu0 0.0
      %350 = vmatpush1.msra.mxu0 %v293
      %351 = vmatprep.subr.mxu0 0.0
      %352 = vmatpush1.msra.mxu0 %v294
      %353 = vmatprep.subr.mxu0 0.0
      %354 = vmatpush1.msra.mxu0 %v295
      %355 = vmatprep.subr.mxu0 0.0
      %356 = vmatpush1.msra.mxu0 %v296
      %357 = vmatprep.subr.mxu0 0.0
      %358 = vmatpush1.msra.mxu0 %v297
      %359 = vmatprep.subr.mxu0 0.0
      %360 = vmatpush1.msra.mxu0 %v298
      %361 = vmatprep.subr.mxu0 0.0
      %362 = vmatpush1.msra.mxu0 %v299
      %363 = vmatprep.subr.mxu0 0.0
      %364 = vmatpush1.msra.mxu0 %v300
      %365 = vmatprep.subr.mxu0 0.0
      %366 = vmatpush1.msra.mxu0 %v301
      %367 = vmatprep.subr.mxu0 0.0
      %368 = vmatpush1.msra.mxu0 %v302
      %369 = vmatprep.subr.mxu0 0.0
      %370 = vmatpush1.msra.mxu0 %v303
      %371 = vmatprep.subr.mxu0 0.0
      %372 = vmatpush1.msra.mxu0 %v304
      %373 = vmatprep.subr.mxu0 0.0
      %374 = vmatpush1.msra.mxu0 0.0
      %375 = vmatprep.subr.mxu0 0.0
      %376 = vmatpush1.msra.mxu0 0.0
      %377 = vmatprep.subr.mxu0 0.0
      %378 = vmatpush1.msra.mxu0 0.0
      %379 = vmatprep.subr.mxu0 0.0
      %380 = vmatpush1.msra.mxu0 0.0
      %381 = vmatprep.subr.mxu0 0.0
      %382 = vmatpush1.msra.mxu0 0.0
      %383 = vmatprep.mubr.f32.mxu0 %v314
      %384 = vmatmul.mubr.f32.gmra.mrb[0].mxu0 %v273
      %v385 = vpop.f32.mrb[0].mxu0
      %v386 = vadd.f32 %v310, %v385
      %v387 = vpop.f32.mrb[0].mxu0
      %388 = vmatprep.mubr.f32.mxu0 %v317
      %389 = vmatmul.mubr.f32.gmra.mrb[0].mxu0 %v274
      %v390 = vpop.f32.mrb[0].mxu0
      %v391 = vadd.f32 %v310, %v390
      %v392 = vpop.f32.mrb[0].mxu0
      %393 = vdwg.mxu0
      %394 = vst [vmem:[%s235] sm:$0xff] %v386
      %395 = vst [vmem:[%s235 + $0x8] sm:$0xff] %v391
      %v396 = vadd.f32 %v386, %v391
      %v397 = vrot.slane %v396, 4
      %v398 = vadd.f32 %v396, %v397
      %v399 = vrot.slane %v398, 2
      %v400 = vadd.f32 %v398, %v399
      %v401 = vrot.slane %v400, 1
      %v402 = vadd.f32 %v400, %v401
      %403 = vst [vmem:[%s238] sm:$0x1] %v402
      %v404 = vmul.f32 %v386, %v386
      %v405 = vmul.f32 %v391, %v391
      %v406 = vadd.f32 %v404, %v405
      %v407 = vrot.slane %v406, 4
      %v408 = vadd.f32 %v406, %v407
      %v409 = vrot.slane %v408, 2
      %v410 = vadd.f32 %v408, %v409
      %v411 = vrot.slane %v410, 1
      %v412 = vadd.f32 %v410, %v411
      %413 = vst [vmem:[%s241] sm:$0x1] %v412
      %p414 = scmp.lt.s32.totalorder %s17, 1
      %s415 = scalar_select %p414, %s17, 1
      %s416 = smul.addr %s415, 2
      %s417 = smul.addr %s416, 8
      %s418 = scalar_lea.vmem %s3, %s417
      %p419 = scmp.lt.s32.totalorder %s17, 1
      %s420 = scalar_select %p419, %s17, 1
      %s421 = scalar_lea.vmem %s4, %s420
      %p422 = scmp.lt.s32.totalorder %s17, 1
      %s423 = scalar_select %p422, %s17, 1
      %s424 = scalar_lea.vmem %s5, %s423
      // Predicated region
      $region33: #{initial_conv_forward.2} parent=31 // pred_check
        %p425 = pneg %p103
      $region34: #{initial_conv_forward.2} parent=31 // pred_check_branch
        %427 = sbr.rel (%p425) target = $region36
      $region35: #{initial_conv_forward.2} parent=31 // pred_region
        _
      $region36: #{initial_conv_forward.2} parent=31 // pred_fallthru
        _
      // Predicated region
      $region37: #{initial_conv_forward.2} parent=31 // pred_check
        %p428 = pneg %p129
      $region38: #{initial_conv_forward.2} parent=31 // pred_check_branch
        %430 = sbr.rel (%p428) target = $region40
      $region39: #{initial_conv_forward.2} parent=31 // pred_region
        _
      $region40: #{initial_conv_forward.2} parent=31 // pred_fallthru
        _
      // Predicated region
      $region41: #{initial_conv_forward.2} parent=31 // pred_check
        %p431 = pneg %p155
      $region42: #{initial_conv_forward.2} parent=31 // pred_check_branch
        %433 = sbr.rel (%p431) target = $region44
      $region43: #{initial_conv_forward.2} parent=31 // pred_region
        _
      $region44: #{initial_conv_forward.2} parent=31 // pred_fallthru
        _
    $region32: #{initial_conv_forward.2} parent=5 // pred_fallthru
      _
    %p434 = scmp.le.s32.totalorder 2, %s12
    // Predicated region
    $region45: #{initial_conv_forward.2} parent=5 // pred_check
      %p435 = pneg %p434
    $region46: #{initial_conv_forward.2} parent=5 // pred_check_branch
      %437 = sbr.rel (%p435) target = $region48
    $region47: #{initial_conv_forward.2} parent=5 // pred_region
      %s438 = ssub.s32 %s12, 2
      // Predicated region
      $region49: #{initial_conv_forward.2} parent=47 // pred_check
        %p439 = pneg %p109
      $region50: #{initial_conv_forward.2} parent=47 // pred_check_branch
        %441 = sbr.rel (%p439) target = $region52
      $region51: #{initial_conv_forward.2} parent=47 // pred_region
        %p442 = scmp.lt.s32.totalorder %s18, 1
        %s443 = scalar_select %p442, %s18, 1
        %s444 = smul.addr %s443, 2
        %s445 = smul.addr %s444, 8
        %s446 = scalar_lea.vmem %s3, %s445
      $region52: #{initial_conv_forward.2} parent=47 // pred_fallthru
        _
      // Predicated region
      $region53: #{initial_conv_forward.2} parent=47 // pred_check
        %p447 = pneg %p135
      $region54: #{initial_conv_forward.2} parent=47 // pred_check_branch
        %449 = sbr.rel (%p447) target = $region56
      $region55: #{initial_conv_forward.2} parent=47 // pred_region
        %p450 = scmp.lt.s32.totalorder %s18, 1
        %s451 = scalar_select %p450, %s18, 1
        %s452 = scalar_lea.vmem %s4, %s451
      $region56: #{initial_conv_forward.2} parent=47 // pred_fallthru
        _
      // Predicated region
      $region57: #{initial_conv_forward.2} parent=47 // pred_check
        %p453 = pneg %p161
      $region58: #{initial_conv_forward.2} parent=47 // pred_check_branch
        %455 = sbr.rel (%p453) target = $region60
      $region59: #{initial_conv_forward.2} parent=47 // pred_region
        %p456 = scmp.lt.s32.totalorder %s18, 1
        %s457 = scalar_select %p456, %s18, 1
        %s458 = scalar_lea.vmem %s5, %s457
      $region60: #{initial_conv_forward.2} parent=47 // pred_fallthru
        _
    $region48: #{initial_conv_forward.2} parent=5 // pred_fallthru
      _
  $region6: #{initial_conv_forward.2} parent=0 // loop_footer
    %s16 = sadd.s32 1, %s12
  $region7: #{initial_conv_forward.2} parent=0 // loop_footer_branch
    %11 = sbr.rel target = $region3
  $region8: #{initial_conv_forward.2} parent=0 // loop_exit
    _

</llo_original>
